<compile_context>
chip_gen: v7x
topology: tpu7x:2x2x1
jax: 0.10.0
libtpu: 0.0.40
codegen_flags: <defaults>
</compile_context>

<pallas_src>
import jax
import jax.numpy as jnp
from jax.experimental import pallas as pl
from jax.experimental.pallas import tpu as pltpu

# Small, TPU-tile-friendly dims
B = 8       # batch
L = 2       # number of LSTM layers (>= 2)
U = 32      # hidden units
E = 32      # embedding dim (== U so layer weights stack cleanly)
V = 128     # vocab size
# NOTE: 2 * L * U == 128 so the packed LSTM state is exactly one (8,128) vreg.
assert 2 * L * U == 128


def _make_seq_kernel(TT, with_loss):
    """Build a kernel for chunks of TT tokens; with_loss toggles the CE path."""
    rows = TT * B

    def kernel(*refs):
        if with_loss:
            (x_ref, t_ref, sin_ref, tab0_ref, whh0_ref, b0_ref,
             wih_ref, whh_ref, bl_ref, wlo_ref, blo_ref,
             state_ref, y_ref, loss_ref, htop_ref) = refs
        else:
            (x_ref, sin_ref, tab0_ref, whh0_ref, b0_ref,
             wih_ref, whh_ref, bl_ref, wlo_ref, blo_ref,
             state_ref, y_ref, htop_ref) = refs
            t_ref = loss_ref = None

        c_idx = pl.program_id(0)

        # Initialize the resident packed-state output from the initial state once.
        @pl.when(c_idx == 0)
        def _():
            state_ref[...] = sin_ref[...]

        # Unpack state ONCE per chunk; h/c are then carried in vregs.
        st = state_ref[...]                                   # (B, 2LU) f32
        hs = [st[:, l * U:(l + 1) * U] for l in range(L)]
        cs = [st[:, (L + l) * U:(L + l + 1) * U] for l in range(L)]

        # ---- batched input projection for the whole chunk (off the recurrence) ----
        # one-hot(x) @ [embed@W_ih0^T] + b0  ->  layer-0 ih gate contribution.
        lane_x = jax.lax.broadcasted_iota(jnp.int32, (rows, V), 1)
        onehot_x = (lane_x == x_ref[0]).astype(jnp.bfloat16)  # (rows, V)
        emb_g = jnp.dot(onehot_x, tab0_ref[...],
                        preferred_element_type=jnp.float32) + b0_ref[...]  # (rows, 4U) f32

        # ---- hoist loop-invariant weight loads / bias broadcasts ----
        whh0 = whh0_ref[...]                                  # (U, 4U) bf16
        wihs = [wih_ref[l] for l in range(L - 1)]
        whhs = [whh_ref[l] for l in range(L - 1)]
        bls = [jnp.broadcast_to(bl_ref[l], (B, 4 * U)) for l in range(L - 1)]

        def cell(gates, c_prev):
            # gates in PyTorch LSTMCell order [i, f, g, o]; full-vreg EUP passes.
            sig = jax.nn.sigmoid(gates)
            th = jnp.tanh(gates)
            i_g = sig[:, 0 * U:1 * U]
            f_g = sig[:, 1 * U:2 * U]
            g_g = th[:, 2 * U:3 * U]
            o_g = sig[:, 3 * U:4 * U]
            c_new = f_g * c_prev + i_g * g_g
            h_new = o_g * jnp.tanh(c_new)
            return h_new, c_new

        # ---- per-token recurrence: only the LSTM cells (head/CE deferred) ----
        for t in range(TT):
            g0 = emb_g[t * B:(t + 1) * B, :] + jnp.dot(
                hs[0].astype(jnp.bfloat16), whh0,
                preferred_element_type=jnp.float32)           # (B, 4U) f32
            hs[0], cs[0] = cell(g0, cs[0])
            inp = hs[0]
            for l in range(1, L):
                gl = (jnp.dot(inp.astype(jnp.bfloat16), wihs[l - 1],
                              preferred_element_type=jnp.float32)
                      + jnp.dot(hs[l].astype(jnp.bfloat16), whhs[l - 1],
                                preferred_element_type=jnp.float32)
                      + bls[l - 1])
                hs[l], cs[l] = cell(gl, cs[l])
                inp = hs[l]
            # Stash top-layer h for the deferred, batched output head.
            htop_ref[t * B:(t + 1) * B, :] = inp

        # Write the packed lane-dense state once per chunk (carry + final output).
        state_ref[...] = jnp.concatenate(hs + cs, axis=1)     # (B, 2LU) == (8,128)

        # ---- deferred output head: one batched matmul per chunk ----
        htop = htop_ref[...].astype(jnp.bfloat16)             # (rows, U)
        z = jnp.dot(htop, wlo_ref[...],
                    preferred_element_type=jnp.float32) + blo_ref[...]     # (rows, V) f32

        # Last-step logits only on the last chunk (single (8,128) store).
        @pl.when(c_idx == pl.num_programs(0) - 1)
        def _():
            y_ref[...] = z[(TT - 1) * B:TT * B, :]

        if with_loss:
            # ---- batched per-sample cross entropy (reduction='none') ----
            lane_t = jax.lax.broadcasted_iota(jnp.int32, (rows, V), 1)
            onehot_t = (lane_t == t_ref[0]).astype(jnp.float32)
            m = jnp.max(z, axis=-1, keepdims=True)
            lse = m + jnp.log(jnp.sum(jnp.exp(z - m), axis=-1, keepdims=True))
            tgt = jnp.sum(z * onehot_t, axis=-1, keepdims=True)
            loss = lse - tgt                                   # (rows, 1)
            loss_ref[...] = loss.reshape(1, rows, 1)           # one tiny store per chunk

    return kernel


def _const_spec(shape):
    nd = len(shape)
    return pl.BlockSpec(shape, lambda c, _nd=nd: (0,) * _nd)


def _chunk_len(T):
    """Largest divisor of T that is <= 32 (TT*B <= 256 fills the MXU rows)."""
    for tt in range(min(T, 32), 0, -1):
        if T % tt == 0:
            return tt
    return 1


def _seq_pallas(params, packed_state, x3, t3, with_loss):
    NC, rows, _ = x3.shape
    TT = rows // B
    kernel = _make_seq_kernel(TT, with_loss)

    chunk_spec = pl.BlockSpec((1, rows, 1), lambda c: (c, 0, 0))
    in_specs = [chunk_spec]
    inputs = [x3]
    if with_loss:
        in_specs.append(chunk_spec)
        inputs.append(t3)
    in_specs += [
        _const_spec((B, 2 * L * U)),          # initial packed state
        _const_spec((V, 4 * U)),              # table0 = embed @ W_ih0^T   (bf16)
        _const_spec((U, 4 * U)),              # W_hh0^T                    (bf16)
        _const_spec((1, 4 * U)),              # b0
        _const_spec((L - 1, U, 4 * U)),       # W_ih_l^T, l>=1             (bf16)
        _const_spec((L - 1, U, 4 * U)),       # W_hh_l^T, l>=1             (bf16)
        _const_spec((L - 1, 1, 4 * U)),       # b_l, l>=1
        _const_spec((U, V)),                  # output head weight         (bf16)
        _const_spec((1, V)),                  # output head bias
    ]
    inputs += [packed_state,
               params["table0"], params["w_hh0"], params["b0"],
               params["w_ih"], params["w_hh"], params["b_l"],
               params["w_lo"], params["b_lo"]]

    out_shapes = [jax.ShapeDtypeStruct((B, 2 * L * U), jnp.float32),   # final packed state
                  jax.ShapeDtypeStruct((B, V), jnp.float32)]           # last-step logits
    out_specs = [pl.BlockSpec((B, 2 * L * U), lambda c: (0, 0)),       # resident carry
                 pl.BlockSpec((B, V), lambda c: (0, 0))]               # resident
    if with_loss:
        out_shapes.append(jax.ShapeDtypeStruct((NC, rows, 1), jnp.float32))
        out_specs.append(pl.BlockSpec((1, rows, 1), lambda c: (c, 0, 0)))

    return pl.pallas_call(
        kernel,
        grid=(NC,),
        in_specs=in_specs,
        out_specs=tuple(out_specs),
        out_shape=tuple(out_shapes),
        scratch_shapes=[pltpu.VMEM((rows, U), jnp.float32)],   # top-layer h stash
        compiler_params=pltpu.CompilerParams(
            dimension_semantics=("arbitrary",)),               # serial token recurrence
    )(*inputs)


def _pack_state(state):
    h, c = state
    return jnp.concatenate(
        [jnp.transpose(h, (1, 0, 2)).reshape(B, L * U),
         jnp.transpose(c, (1, 0, 2)).reshape(B, L * U)], axis=1)          # (B, 2LU)


def _unpack_state(state_out):
    h_new = state_out[:, :L * U].reshape(B, L, U).transpose(1, 0, 2)
    c_new = state_out[:, L * U:].reshape(B, L, U).transpose(1, 0, 2)
    return h_new, c_new


@jax.jit
def rnnlm_sequence(params, state, x_seq, t_seq):
    """Run T RNNLM steps + per-step CE loss in ONE pallas_call (chunked tokens).

    x_seq, t_seq: (T, B) int32 token ids / targets.
    state: (h, c) each (L, B, U) f32.
    Returns ((h_new, c_new), last_step_logits (B,V), losses (T,B)).
    """
    T = x_seq.shape[0]
    TT = _chunk_len(T)
    NC = T // TT
    x3 = x_seq.reshape(NC, TT * B, 1).astype(jnp.int32)
    t3 = t_seq.reshape(NC, TT * B, 1).astype(jnp.int32)
    state_out, y_last, loss_out = _seq_pallas(params, _pack_state(state), x3, t3, True)
    return _unpack_state(state_out), y_last, loss_out.reshape(T, B)


@jax.jit
def rnnlm_logits(params, state, x_seq):
    """Loss-free variant (used by predict): same recurrence, no CE / loss output."""
    T = x_seq.shape[0]
    TT = _chunk_len(T)
    NC = T // TT
    x3 = x_seq.reshape(NC, TT * B, 1).astype(jnp.int32)
    state_out, y_last = _seq_pallas(params, _pack_state(state), x3, None, False)
    return _unpack_state(state_out), y_last


def zero_state():
    return (jnp.zeros((L, B, U), jnp.float32),
            jnp.zeros((L, B, U), jnp.float32))


class ClassifierWithState:
    """JAX/Pallas port of espnet ClassifierWithState wrapping the default RNNLM."""

    def __init__(self, params, label_key=-1):
        if not isinstance(label_key, (int, str)):
            raise TypeError("label_key must be int or str, but is %s" % type(label_key))
        self.params = params
        self.label_key = label_key
        self.y = None
        self.loss = None

    def forward(self, state, *args, **kwargs):
        if isinstance(self.label_key, int):
            if not -len(args) <= self.label_key < len(args):
                raise ValueError("Label key %d is out of bounds" % self.label_key)
            t = args[self.label_key]
            if self.label_key == -1:
                args = args[:-1]
            else:
                args = args[:self.label_key] + args[self.label_key + 1:]
        else:
            if self.label_key not in kwargs:
                raise ValueError('Label key "%s" is not found' % self.label_key)
            t = kwargs.pop(self.label_key)
        (x,) = args
        if state is None:
            state = zero_state()
        self.y = None
        self.loss = None
        state, self.y, losses = rnnlm_sequence(
            self.params, state, x.reshape(1, B), t.reshape(1, B))
        self.loss = losses[0]
        return state, self.loss

    def forward_sequence(self, state, x_seq, t_seq):
        """Fused multi-token path: T steps in a single kernel launch."""
        if state is None:
            state = zero_state()
        state, self.y, losses = rnnlm_sequence(self.params, state, x_seq, t_seq)
        self.loss = losses
        return state, losses

    def predict(self, state, x):
        # predictor is not "normalized": apply log_softmax over dim=1 (glue, outside kernel)
        if state is None:
            state = zero_state()
        state, z = rnnlm_logits(self.params, state, x.reshape(1, B))
        return state, jax.nn.log_softmax(z, axis=1)

    def final(self, state, index=None):
        # default RNNLM has no `final`; matches the 0.0 fallback
        return 0.0


def make_raw_params(key):
    """PyTorch-layout parameters of the espnet default RNNLM."""
    ks = jax.random.split(key, 7)
    s = 0.1
    return {
        "embed": s * jax.random.normal(ks[0], (V, E), jnp.float32),        # nn.Embedding(V, E)
        "w_ih": s * jax.random.normal(ks[1], (L, 4 * U, U), jnp.float32),  # LSTMCell.weight_ih (4U, in), [i,f,g,o]
        "w_hh": s * jax.random.normal(ks[2], (L, 4 * U, U), jnp.float32),  # LSTMCell.weight_hh (4U, U)
        "b_ih": s * jax.random.normal(ks[3], (L, 4 * U), jnp.float32),
        "b_hh": s * jax.random.normal(ks[4], (L, 4 * U), jnp.float32),
        "w_lo": s * jax.random.normal(ks[5], (V, U), jnp.float32),         # nn.Linear(U, V).weight
        "b_lo": s * jax.random.normal(ks[6], (V,), jnp.float32),
    }


def pack_params(raw):
    """Fold/transpose PyTorch-layout params into the kernel layout (bf16 MXU operands)."""
    w_ih_t = jnp.transpose(raw["w_ih"], (0, 2, 1))        # (L, in, 4U), gate order [i,f,g,o] on columns
    w_hh_t = jnp.transpose(raw["w_hh"], (0, 2, 1))        # (L, U, 4U)
    b = raw["b_ih"] + raw["b_hh"]                         # (L, 4U)  (biases summed)
    table0 = raw["embed"] @ w_ih_t[0]                     # (V, 4U)  embedding folded into layer-0 ih
    return {
        "table0": table0.astype(jnp.bfloat16),            # (V, 4U)
        "w_hh0": w_hh_t[0].astype(jnp.bfloat16),          # (U, 4U)
        "b0": b[0].reshape(1, 4 * U),                     # f32
        "w_ih": w_ih_t[1:].astype(jnp.bfloat16),          # (L-1, U, 4U)
        "w_hh": w_hh_t[1:].astype(jnp.bfloat16),          # (L-1, U, 4U)
        "b_l": b[1:].reshape(L - 1, 1, 4 * U),            # f32
        "w_lo": jnp.transpose(raw["w_lo"]).astype(jnp.bfloat16),  # (U, V)
        "b_lo": raw["b_lo"].reshape(1, V),                # f32
    }


if __name__ == "__main__":
    key = jax.random.PRNGKey(0)
    pkey, xkey, tkey = jax.random.split(key, 3)
    params = pack_params(make_raw_params(pkey))

    T = 8
    x_seq = jax.random.randint(xkey, (T, B), 0, V, dtype=jnp.int32)   # input token ids
    t_seq = jax.random.randint(tkey, (T, B), 0, V, dtype=jnp.int32)   # target token ids

    model = ClassifierWithState(params, label_key=-1)

    # --- single-step forward (module semantics): args = (x, t), t is the label ---
    state, loss0 = model.forward(None, x_seq[0], t_seq[0])
    jax.block_until_ready(loss0)
    jax.block_until_ready(state)
    assert loss0.shape == (B,)
    assert model.y.shape == (B, V)
    assert state[0].shape == (L, B, U) and state[1].shape == (L, B, U)
    assert bool(jnp.all(jnp.isfinite(loss0)))

    # --- fused T-step kernel (single launch, weights resident, chunked tokens) ---
    (h_f, c_f), y_last_f, losses_f = rnnlm_sequence(params, zero_state(), x_seq, t_seq)
    jax.block_until_ready(losses_f)
    assert losses_f.shape == (T, B)
    assert bool(jnp.all(jnp.isfinite(losses_f)))

    # --- consistency: fused T-step == T single-step forward() calls ---
    state = None
    losses_step = []
    for i in range(T):
        state, li = model.forward(state, x_seq[i], t_seq[i])
        losses_step.append(li)
    losses_step = jnp.stack(losses_step)
    assert bool(jnp.allclose(losses_step, losses_f, rtol=1e-5, atol=1e-5))
    assert bool(jnp.allclose(state[0], h_f, rtol=1e-5, atol=1e-5))
    assert bool(jnp.allclose(state[1], c_f, rtol=1e-5, atol=1e-5))
    assert bool(jnp.allclose(model.y, y_last_f, rtol=1e-5, atol=1e-5))

    # --- predict() path (loss-free kernel; log_softmax glue outside the kernel) ---
    st_p, logp = model.predict(None, x_seq[0])
    jax.block_until_ready(logp)
    assert logp.shape == (B, V)
    assert bool(jnp.all(jnp.isfinite(logp)))

    print("KERNEL_OK")
</pallas_src>

<mosaic_0001>
module attributes {stable_mosaic.version = 11 : i64} {
  func.func @kernel(%arg0: i32, %arg1: memref<1x8x1xi32, #tpu.memory_space<vmem>>, %arg2: memref<1x8x1xi32, #tpu.memory_space<vmem>>, %arg3: memref<8x128xf32, #tpu.memory_space<vmem>>, %arg4: memref<128x128xbf16, #tpu.memory_space<vmem>>, %arg5: memref<32x128xbf16, #tpu.memory_space<vmem>>, %arg6: memref<1x128xf32, #tpu.memory_space<vmem>>, %arg7: memref<1x32x128xbf16, #tpu.memory_space<vmem>>, %arg8: memref<1x32x128xbf16, #tpu.memory_space<vmem>>, %arg9: memref<1x1x128xf32, #tpu.memory_space<vmem>>, %arg10: memref<32x128xbf16, #tpu.memory_space<vmem>>, %arg11: memref<1x128xf32, #tpu.memory_space<vmem>>, %arg12: memref<8x128xf32, #tpu.memory_space<vmem>>, %arg13: memref<8x128xf32, #tpu.memory_space<vmem>>, %arg14: memref<1x8x1xf32, #tpu.memory_space<vmem>>, %arg15: memref<8x32xf32, #tpu.memory_space<vmem>>) attributes {dimension_semantics = [#tpu.dimension_semantics<arbitrary>], iteration_bounds = array<i64: 1>, scalar_prefetch = 0 : i64, scratch_operands = 1 : i64, tpu.core_type = #tpu.core_type<tc>, window_params = [{transform_indices = @transform_0, window_bounds = array<i64: 1, 8, 1>}, {transform_indices = @transform_1, window_bounds = array<i64: 1, 8, 1>}, {pipeline_mode = #tpu.pipeline_mode<synchronous>, transform_indices = @transform_2, window_bounds = array<i64: 8, 128>}, {pipeline_mode = #tpu.pipeline_mode<synchronous>, transform_indices = @transform_3, window_bounds = array<i64: 128, 128>}, {pipeline_mode = #tpu.pipeline_mode<synchronous>, transform_indices = @transform_4, window_bounds = array<i64: 32, 128>}, {pipeline_mode = #tpu.pipeline_mode<synchronous>, transform_indices = @transform_5, window_bounds = array<i64: 1, 128>}, {pipeline_mode = #tpu.pipeline_mode<synchronous>, transform_indices = @transform_6, window_bounds = array<i64: 1, 32, 128>}, {pipeline_mode = #tpu.pipeline_mode<synchronous>, transform_indices = @transform_7, window_bounds = array<i64: 1, 32, 128>}, {pipeline_mode = #tpu.pipeline_mode<synchronous>, transform_indices = @transform_8, window_bounds = array<i64: 1, 1, 128>}, {pipeline_mode = #tpu.pipeline_mode<synchronous>, transform_indices = @transform_9, window_bounds = array<i64: 32, 128>}, {pipeline_mode = #tpu.pipeline_mode<synchronous>, transform_indices = @transform_10, window_bounds = array<i64: 1, 128>}, {pipeline_mode = #tpu.pipeline_mode<synchronous>, transform_indices = @transform_11, window_bounds = array<i64: 8, 128>}, {pipeline_mode = #tpu.pipeline_mode<synchronous>, transform_indices = @transform_12, window_bounds = array<i64: 8, 128>}, {transform_indices = @transform_13, window_bounds = array<i64: 1, 8, 1>}]} {
    %c0_i32 = arith.constant 0 : i32
    %0 = arith.cmpi eq, %arg0, %c0_i32 : i32
    %1 = arith.extui %0 : i1 to i32
    %c0_i32_0 = arith.constant 0 : i32
    %2 = arith.cmpi ne, %1, %c0_i32_0 : i32
    scf.if %2 {
      %c0_47 = arith.constant 0 : index
      %c0_48 = arith.constant 0 : index
      %104 = vector.load %arg3[%c0_47, %c0_48] : memref<8x128xf32, #tpu.memory_space<vmem>>, vector<8x128xf32>
      %c0_49 = arith.constant 0 : index
      %c0_50 = arith.constant 0 : index
      %105 = vector.load %arg12[%c0_49, %c0_50] : memref<8x128xf32, #tpu.memory_space<vmem>>, vector<8x128xf32>
      tpu.vector_store %arg12[%c0_49, %c0_50], %104 {strides = array<i32>} : memref<8x128xf32, #tpu.memory_space<vmem>>, vector<8x128xf32>,
    } else {
    }
    %c0 = arith.constant 0 : index
    %c0_1 = arith.constant 0 : index
    %3 = vector.load %arg12[%c0, %c0_1] : memref<8x128xf32, #tpu.memory_space<vmem>>, vector<8x128xf32>
    %4 = vector.extract_strided_slice %3 {offsets = [0, 0], sizes = [8, 32], strides = [1, 1]} : vector<8x128xf32> to vector<8x32xf32>
    %5 = vector.extract_strided_slice %3 {offsets = [0, 32], sizes = [8, 32], strides = [1, 1]} : vector<8x128xf32> to vector<8x32xf32>
    %6 = vector.extract_strided_slice %3 {offsets = [0, 64], sizes = [8, 32], strides = [1, 1]} : vector<8x128xf32> to vector<8x32xf32>
    %7 = vector.extract_strided_slice %3 {offsets = [0, 96], sizes = [8, 32], strides = [1, 1]} : vector<8x128xf32> to vector<8x32xf32>
    %8 = tpu.iota {dimensions = array<i32: 1>} : vector<8x128xi32>
    %c0_2 = arith.constant 0 : index
    %c0_3 = arith.constant 0 : index
    %c0_4 = arith.constant 0 : index
    %9 = vector.load %arg1[%c0_2, %c0_3, %c0_4] : memref<1x8x1xi32, #tpu.memory_space<vmem>>, vector<1x8x1xi32>
    %10 = vector.shape_cast %9 : vector<1x8x1xi32> to vector<8x1xi32>
    %11 = vector.broadcast %10 : vector<8x1xi32> to vector<8x128xi32>
    %12 = arith.cmpi eq, %8, %11 : vector<8x128xi32>
    %13 = arith.extui %12 : vector<8x128xi1> to vector<8x128xi32>
    %14 = arith.sitofp %13 : vector<8x128xi32> to vector<8x128xf32>
    %15 = arith.truncf %14 : vector<8x128xf32> to vector<8x128xbf16>
    %c0_5 = arith.constant 0 : index
    %c0_6 = arith.constant 0 : index
    %16 = vector.load %arg4[%c0_5, %c0_6] : memref<128x128xbf16, #tpu.memory_space<vmem>>, vector<128x128xbf16>
    %cst = arith.constant dense<0.000000e+00> : vector<8x128xf32>
    %17 = tpu.matmul %15, %16, %cst {dimension_numbers = #tpu.dot_dimension_numbers<[1], [0], [0], [1], [0, 0, 1, 1], [], []>} : vector<8x128xbf16>, vector<128x128xbf16>, vector<8x128xf32> -> vector<8x128xf32>
    %c0_7 = arith.constant 0 : index
    %c0_8 = arith.constant 0 : index
    %18 = vector.load %arg6[%c0_7, %c0_8] : memref<1x128xf32, #tpu.memory_space<vmem>>, vector<1x128xf32>
    %19 = vector.broadcast %18 : vector<1x128xf32> to vector<8x128xf32>
    %20 = arith.addf %17, %19 : vector<8x128xf32>
    %c0_9 = arith.constant 0 : index
    %c0_10 = arith.constant 0 : index
    %21 = vector.load %arg5[%c0_9, %c0_10] : memref<32x128xbf16, #tpu.memory_space<vmem>>, vector<32x128xbf16>
    %c0_11 = arith.constant 0 : index
    %c0_12 = arith.constant 0 : index
    %c0_13 = arith.constant 0 : index
    %22 = vector.load %arg7[%c0_11, %c0_12, %c0_13] : memref<1x32x128xbf16, #tpu.memory_space<vmem>>, vector<1x32x128xbf16>
    %23 = vector.shape_cast %22 : vector<1x32x128xbf16> to vector<32x128xbf16>
    %c0_14 = arith.constant 0 : index
    %c0_15 = arith.constant 0 : index
    %c0_16 = arith.constant 0 : index
    %24 = vector.load %arg8[%c0_14, %c0_15, %c0_16] : memref<1x32x128xbf16, #tpu.memory_space<vmem>>, vector<1x32x128xbf16>
    %25 = vector.shape_cast %24 : vector<1x32x128xbf16> to vector<32x128xbf16>
    %c0_17 = arith.constant 0 : index
    %c0_18 = arith.constant 0 : index
    %c0_19 = arith.constant 0 : index
    %26 = vector.load %arg9[%c0_17, %c0_18, %c0_19] : memref<1x1x128xf32, #tpu.memory_space<vmem>>, vector<1x1x128xf32>
    %27 = vector.shape_cast %26 : vector<1x1x128xf32> to vector<1x128xf32>
    %28 = vector.shape_cast %27 : vector<1x128xf32> to vector<1x128xf32>
    %29 = vector.broadcast %28 : vector<1x128xf32> to vector<8x128xf32>
    %30 = arith.truncf %4 : vector<8x32xf32> to vector<8x32xbf16>
    %cst_20 = arith.constant dense<0.000000e+00> : vector<8x128xf32>
    %31 = tpu.matmul %30, %21, %cst_20 {dimension_numbers = #tpu.dot_dimension_numbers<[1], [0], [0], [1], [0, 0, 1, 1], [], []>} : vector<8x32xbf16>, vector<32x128xbf16>, vector<8x128xf32> -> vector<8x128xf32>
    %32 = arith.addf %20, %31 : vector<8x128xf32>
    %33 = arith.negf %32 : vector<8x128xf32>
    %34 = math.exp %33 : vector<8x128xf32>
    %cst_21 = arith.constant 1.000000e+00 : f32
    %35 = vector.broadcast %cst_21 : f32 to vector<8x128xf32>
    %36 = arith.addf %35, %34 : vector<8x128xf32>
    %37 = arith.divf %35, %36 : vector<8x128xf32>
    %38 = math.tanh %32 : vector<8x128xf32>
    %39 = vector.extract_strided_slice %37 {offsets = [0, 0], sizes = [8, 32], strides = [1, 1]} : vector<8x128xf32> to vector<8x32xf32>
    %40 = vector.extract_strided_slice %37 {offsets = [0, 32], sizes = [8, 32], strides = [1, 1]} : vector<8x128xf32> to vector<8x32xf32>
    %41 = vector.extract_strided_slice %38 {offsets = [0, 64], sizes = [8, 32], strides = [1, 1]} : vector<8x128xf32> to vector<8x32xf32>
    %42 = vector.extract_strided_slice %37 {offsets = [0, 96], sizes = [8, 32], strides = [1, 1]} : vector<8x128xf32> to vector<8x32xf32>
    %43 = arith.mulf %40, %6 : vector<8x32xf32>
    %44 = arith.mulf %39, %41 : vector<8x32xf32>
    %45 = arith.addf %43, %44 : vector<8x32xf32>
    %46 = math.tanh %45 : vector<8x32xf32>
    %47 = arith.mulf %42, %46 : vector<8x32xf32>
    %48 = arith.truncf %47 : vector<8x32xf32> to vector<8x32xbf16>
    %cst_22 = arith.constant dense<0.000000e+00> : vector<8x128xf32>
    %49 = tpu.matmul %48, %23, %cst_22 {dimension_numbers = #tpu.dot_dimension_numbers<[1], [0], [0], [1], [0, 0, 1, 1], [], []>} : vector<8x32xbf16>, vector<32x128xbf16>, vector<8x128xf32> -> vector<8x128xf32>
    %50 = arith.truncf %5 : vector<8x32xf32> to vector<8x32xbf16>
    %cst_23 = arith.constant dense<0.000000e+00> : vector<8x128xf32>
    %51 = tpu.matmul %50, %25, %cst_23 {dimension_numbers = #tpu.dot_dimension_numbers<[1], [0], [0], [1], [0, 0, 1, 1], [], []>} : vector<8x32xbf16>, vector<32x128xbf16>, vector<8x128xf32> -> vector<8x128xf32>
    %52 = arith.addf %49, %51 : vector<8x128xf32>
    %53 = arith.addf %52, %29 : vector<8x128xf32>
    %54 = arith.negf %53 : vector<8x128xf32>
    %55 = math.exp %54 : vector<8x128xf32>
    %cst_24 = arith.constant 1.000000e+00 : f32
    %56 = vector.broadcast %cst_24 : f32 to vector<8x128xf32>
    %57 = arith.addf %56, %55 : vector<8x128xf32>
    %58 = arith.divf %56, %57 : vector<8x128xf32>
    %59 = math.tanh %53 : vector<8x128xf32>
    %60 = vector.extract_strided_slice %58 {offsets = [0, 0], sizes = [8, 32], strides = [1, 1]} : vector<8x128xf32> to vector<8x32xf32>
    %61 = vector.extract_strided_slice %58 {offsets = [0, 32], sizes = [8, 32], strides = [1, 1]} : vector<8x128xf32> to vector<8x32xf32>
    %62 = vector.extract_strided_slice %59 {offsets = [0, 64], sizes = [8, 32], strides = [1, 1]} : vector<8x128xf32> to vector<8x32xf32>
    %63 = vector.extract_strided_slice %58 {offsets = [0, 96], sizes = [8, 32], strides = [1, 1]} : vector<8x128xf32> to vector<8x32xf32>
    %64 = arith.mulf %61, %7 : vector<8x32xf32>
    %65 = arith.mulf %60, %62 : vector<8x32xf32>
    %66 = arith.addf %64, %65 : vector<8x32xf32>
    %67 = math.tanh %66 : vector<8x32xf32>
    %68 = arith.mulf %63, %67 : vector<8x32xf32>
    %c0_25 = arith.constant 0 : index
    %c0_26 = arith.constant 0 : index
    %69 = vector.load %arg15[%c0_25, %c0_26] : memref<8x32xf32, #tpu.memory_space<vmem>>, vector<8x32xf32>
    tpu.vector_store %arg15[%c0_25, %c0_26], %68 {strides = array<i32>} : memref<8x32xf32, #tpu.memory_space<vmem>>, vector<8x32xf32>,
    %70 = tpu.concatenate %47, %68, %45, %66 in 1 : vector<8x32xf32>, vector<8x32xf32>, vector<8x32xf32>, vector<8x32xf32> -> vector<8x128xf32>
    %c0_27 = arith.constant 0 : index
    %c0_28 = arith.constant 0 : index
    %71 = vector.load %arg12[%c0_27, %c0_28] : memref<8x128xf32, #tpu.memory_space<vmem>>, vector<8x128xf32>
    tpu.vector_store %arg12[%c0_27, %c0_28], %70 {strides = array<i32>} : memref<8x128xf32, #tpu.memory_space<vmem>>, vector<8x128xf32>,
    %c0_29 = arith.constant 0 : index
    %c0_30 = arith.constant 0 : index
    %72 = vector.load %arg15[%c0_29, %c0_30] : memref<8x32xf32, #tpu.memory_space<vmem>>, vector<8x32xf32>
    %73 = arith.truncf %72 : vector<8x32xf32> to vector<8x32xbf16>
    %c0_31 = arith.constant 0 : index
    %c0_32 = arith.constant 0 : index
    %74 = vector.load %arg10[%c0_31, %c0_32] : memref<32x128xbf16, #tpu.memory_space<vmem>>, vector<32x128xbf16>
    %cst_33 = arith.constant dense<0.000000e+00> : vector<8x128xf32>
    %75 = tpu.matmul %73, %74, %cst_33 {dimension_numbers = #tpu.dot_dimension_numbers<[1], [0], [0], [1], [0, 0, 1, 1], [], []>} : vector<8x32xbf16>, vector<32x128xbf16>, vector<8x128xf32> -> vector<8x128xf32>
    %c0_34 = arith.constant 0 : index
    %c0_35 = arith.constant 0 : index
    %76 = vector.load %arg11[%c0_34, %c0_35] : memref<1x128xf32, #tpu.memory_space<vmem>>, vector<1x128xf32>
    %77 = vector.broadcast %76 : vector<1x128xf32> to vector<8x128xf32>
    %78 = arith.addf %75, %77 : vector<8x128xf32>
    %c0_i32_36 = arith.constant 0 : i32
    %79 = arith.cmpi eq, %arg0, %c0_i32_36 : i32
    %80 = arith.extui %79 : i1 to i32
    %c0_i32_37 = arith.constant 0 : i32
    %81 = arith.cmpi ne, %80, %c0_i32_37 : i32
    scf.if %81 {
      %c0_47 = arith.constant 0 : index
      %c0_48 = arith.constant 0 : index
      %104 = vector.load %arg13[%c0_47, %c0_48] : memref<8x128xf32, #tpu.memory_space<vmem>>, vector<8x128xf32>
      tpu.vector_store %arg13[%c0_47, %c0_48], %78 {strides = array<i32>} : memref<8x128xf32, #tpu.memory_space<vmem>>, vector<8x128xf32>,
    } else {
    }
    %82 = tpu.iota {dimensions = array<i32: 1>} : vector<8x128xi32>
    %c0_38 = arith.constant 0 : index
    %c0_39 = arith.constant 0 : index
    %c0_40 = arith.constant 0 : index
    %83 = vector.load %arg2[%c0_38, %c0_39, %c0_40] : memref<1x8x1xi32, #tpu.memory_space<vmem>>, vector<1x8x1xi32>
    %84 = vector.shape_cast %83 : vector<1x8x1xi32> to vector<8x1xi32>
    %85 = vector.broadcast %84 : vector<8x1xi32> to vector<8x128xi32>
    %86 = arith.cmpi eq, %82, %85 : vector<8x128xi32>
    %87 = arith.extui %86 : vector<8x128xi1> to vector<8x128xi32>
    %88 = arith.sitofp %87 : vector<8x128xi32> to vector<8x128xf32>
    %cst_41 = arith.constant dense<0xFF800000> : vector<8xf32>
    %89 = vector.multi_reduction <maximumf>, %78, %cst_41 [1] : vector<8x128xf32> to vector<8xf32>
    %90 = vector.shape_cast %89 : vector<8xf32> to vector<8x1xf32>
    %91 = vector.broadcast %90 : vector<8x1xf32> to vector<8x128xf32>
    %92 = arith.subf %78, %91 : vector<8x128xf32>
    %93 = math.exp %92 : vector<8x128xf32>
    %cst_42 = arith.constant dense<0.000000e+00> : vector<8xf32>
    %94 = vector.multi_reduction <add>, %93, %cst_42 [1] : vector<8x128xf32> to vector<8xf32>
    %95 = vector.shape_cast %94 : vector<8xf32> to vector<8x1xf32>
    %96 = math.log %95 : vector<8x1xf32>
    %97 = arith.addf %90, %96 : vector<8x1xf32>
    %98 = arith.mulf %78, %88 : vector<8x128xf32>
    %cst_43 = arith.constant dense<0.000000e+00> : vector<8xf32>
    %99 = vector.multi_reduction <add>, %98, %cst_43 [1] : vector<8x128xf32> to vector<8xf32>
    %100 = vector.shape_cast %99 : vector<8xf32> to vector<8x1xf32>
    %101 = arith.subf %97, %100 : vector<8x1xf32>
    %102 = vector.shape_cast %101 : vector<8x1xf32> to vector<1x8x1xf32>
    %c0_44 = arith.constant 0 : index
    %c0_45 = arith.constant 0 : index
    %c0_46 = arith.constant 0 : index
    %103 = vector.load %arg14[%c0_44, %c0_45, %c0_46] : memref<1x8x1xf32, #tpu.memory_space<vmem>>, vector<1x8x1xf32>
    tpu.vector_store %arg14[%c0_44, %c0_45, %c0_46], %102 {strides = array<i32>} : memref<1x8x1xf32, #tpu.memory_space<vmem>>, vector<1x8x1xf32>,
    return
  }
  func.func @transform_0(%arg0: i32) -> (i32, i32, i32) {
    %c0_i32 = arith.constant 0 : i32
    %c0_i32_0 = arith.constant 0 : i32
    %c0_i32_1 = arith.constant 0 : i32
    return %arg0, %c0_i32, %c0_i32_0 : i32, i32, i32
  }
  func.func @transform_1(%arg0: i32) -> (i32, i32, i32) {
    %c0_i32 = arith.constant 0 : i32
    %c0_i32_0 = arith.constant 0 : i32
    %c0_i32_1 = arith.constant 0 : i32
    return %arg0, %c0_i32, %c0_i32_0 : i32, i32, i32
  }
  func.func @transform_2(%arg0: i32) -> (i32, i32) {
    %c0_i32 = arith.constant 0 : i32
    %c0_i32_0 = arith.constant 0 : i32
    %c0_i32_1 = arith.constant 0 : i32
    return %c0_i32, %c0_i32_0 : i32, i32
  }
  func.func @transform_3(%arg0: i32) -> (i32, i32) {
    %c0_i32 = arith.constant 0 : i32
    %c0_i32_0 = arith.constant 0 : i32
    %c0_i32_1 = arith.constant 0 : i32
    return %c0_i32, %c0_i32_0 : i32, i32
  }
  func.func @transform_4(%arg0: i32) -> (i32, i32) {
    %c0_i32 = arith.constant 0 : i32
    %c0_i32_0 = arith.constant 0 : i32
    %c0_i32_1 = arith.constant 0 : i32
    return %c0_i32, %c0_i32_0 : i32, i32
  }
  func.func @transform_5(%arg0: i32) -> (i32, i32) {
    %c0_i32 = arith.constant 0 : i32
    %c0_i32_0 = arith.constant 0 : i32
    %c0_i32_1 = arith.constant 0 : i32
    return %c0_i32, %c0_i32_0 : i32, i32
  }
  func.func @transform_6(%arg0: i32) -> (i32, i32, i32) {
    %c0_i32 = arith.constant 0 : i32
    %c0_i32_0 = arith.constant 0 : i32
    %c0_i32_1 = arith.constant 0 : i32
    %c0_i32_2 = arith.constant 0 : i32
    return %c0_i32, %c0_i32_0, %c0_i32_1 : i32, i32, i32
  }
  func.func @transform_7(%arg0: i32) -> (i32, i32, i32) {
    %c0_i32 = arith.constant 0 : i32
    %c0_i32_0 = arith.constant 0 : i32
    %c0_i32_1 = arith.constant 0 : i32
    %c0_i32_2 = arith.constant 0 : i32
    return %c0_i32, %c0_i32_0, %c0_i32_1 : i32, i32, i32
  }
  func.func @transform_8(%arg0: i32) -> (i32, i32, i32) {
    %c0_i32 = arith.constant 0 : i32
    %c0_i32_0 = arith.constant 0 : i32
    %c0_i32_1 = arith.constant 0 : i32
    %c0_i32_2 = arith.constant 0 : i32
    return %c0_i32, %c0_i32_0, %c0_i32_1 : i32, i32, i32
  }
  func.func @transform_9(%arg0: i32) -> (i32, i32) {
    %c0_i32 = arith.constant 0 : i32
    %c0_i32_0 = arith.constant 0 : i32
    %c0_i32_1 = arith.constant 0 : i32
    return %c0_i32, %c0_i32_0 : i32, i32
  }
  func.func @transform_10(%arg0: i32) -> (i32, i32) {
    %c0_i32 = arith.constant 0 : i32
    %c0_i32_0 = arith.constant 0 : i32
    %c0_i32_1 = arith.constant 0 : i32
    return %c0_i32, %c0_i32_0 : i32, i32
  }
  func.func @transform_11(%arg0: i32) -> (i32, i32) {
    %c0_i32 = arith.constant 0 : i32
    %c0_i32_0 = arith.constant 0 : i32
    %c0_i32_1 = arith.constant 0 : i32
    return %c0_i32, %c0_i32_0 : i32, i32
  }
  func.func @transform_12(%arg0: i32) -> (i32, i32) {
    %c0_i32 = arith.constant 0 : i32
    %c0_i32_0 = arith.constant 0 : i32
    %c0_i32_1 = arith.constant 0 : i32
    return %c0_i32, %c0_i32_0 : i32, i32
  }
  func.func @transform_13(%arg0: i32) -> (i32, i32, i32) {
    %c0_i32 = arith.constant 0 : i32
    %c0_i32_0 = arith.constant 0 : i32
    %c0_i32_1 = arith.constant 0 : i32
    return %arg0, %c0_i32, %c0_i32_0 : i32, i32, i32
  }
}

</mosaic_0001>

<llo_original>
// kernel: rnnlm_sequence.1
$region0: #{rnnlm_sequence.1}
  #allocation0 [shape = 'u32[]', space=smem, size = 0x4, offset = 0x4, fixed_abs, tag = 'smem constant byte address 0x4 - core index']
  #allocation1 [shape = 'u32[144,128]{1,0:T(1,128)}', space=vmem, size = 0x12000, scoped, tag = 'internal scratch']
  #allocation2 [shape = 'f32[8,32]{1,0:T(8,128)}', space=vmem, size = 0x1000, scoped, tag = 'scratch operand']
  %s0 = inlined_call_operand.vmem [shape: s32[1,8,1], index: 0, kind: input, shape index: {}]
  %s1 = inlined_call_operand.vmem [shape: s32[1,8,1], index: 1, kind: input, shape index: {}]
  %s2 = inlined_call_operand.vmem [shape: f32[8,128], index: 2, kind: input, shape index: {}]
  %s3 = inlined_call_operand.vmem [shape: bf16[128,128], index: 3, kind: input, shape index: {}]
  %s4 = inlined_call_operand.vmem [shape: bf16[32,128], index: 4, kind: input, shape index: {}]
  %s5 = inlined_call_operand.vmem [shape: f32[1,128], index: 5, kind: input, shape index: {}]
  %s6 = inlined_call_operand.vmem [shape: bf16[1,32,128], index: 6, kind: input, shape index: {}]
  %s7 = inlined_call_operand.vmem [shape: bf16[1,32,128], index: 7, kind: input, shape index: {}]
  %s8 = inlined_call_operand.vmem [shape: f32[1,1,128], index: 8, kind: input, shape index: {}]
  %s9 = inlined_call_operand.vmem [shape: bf16[32,128], index: 9, kind: input, shape index: {}]
  %s10 = inlined_call_operand.vmem [shape: f32[1,128], index: 10, kind: input, shape index: {}]
  %s11 = inlined_call_operand.vmem [shape: f32[8,128], index: 11, kind: output, shape index: {0}]
  %s12 = inlined_call_operand.hbm [shape: f32[8,128], index: 12, kind: output, shape index: {1}]
  %s13 = inlined_call_operand.vmem [shape: f32[1,8,1], index: 13, kind: output, shape index: {2}]
  %14 = xla_tuple %s11, %s12, %s13
  %s15 = sld [smem:[#allocation0]]
  $region78: #{rnnlm_sequence.1} parent=0
    _
  %s17 = ssub.s32 1, %s15
  %s18 = scalar_select 0, %s17, %s15
  $region1: #{rnnlm_sequence.1} parent=0
    #allocation3 [shape = 'u8[4096]{0}', space=vmem, size = 0x1000, scoped, tag = 'output window, operand 1, single buffered']
    #allocation4 [shape = 's32[1]{0}', space=sflag, size = 0x4, scoped, tag = 'scoped memory for rnnlm_sequence.1']
    %19 = vsyncpa [#allocation4], 0
    // Predicated region
    $region2: #{rnnlm_sequence.1} parent=1 // pred_check
      _
    $region3: #{rnnlm_sequence.1} parent=1 // pred_check_branch
      %21 = sbr.rel (0) target = $region5
    $region4: #{rnnlm_sequence.1} parent=1 // pred_region
      _
    $region5: #{rnnlm_sequence.1} parent=1 // pred_fallthru
      _
    // Predicated region
    $region6: #{rnnlm_sequence.1} parent=1 // pred_check
      _
    $region7: #{rnnlm_sequence.1} parent=1 // pred_check_branch
      %23 = sbr.rel (0) target = $region9
    $region8: #{rnnlm_sequence.1} parent=1 // pred_region
      _
    $region9: #{rnnlm_sequence.1} parent=1 // pred_fallthru
      _
    // Predicated region
    $region10: #{rnnlm_sequence.1} parent=1 // pred_check
      _
    $region11: #{rnnlm_sequence.1} parent=1 // pred_check_branch
      %25 = sbr.rel (0) target = $region13
    $region12: #{rnnlm_sequence.1} parent=1 // pred_region
      _
    $region13: #{rnnlm_sequence.1} parent=1 // pred_fallthru
      _
    // Predicated region
    $region14: #{rnnlm_sequence.1} parent=1 // pred_check
      _
    $region15: #{rnnlm_sequence.1} parent=1 // pred_check_branch
      %27 = sbr.rel (0) target = $region17
    $region16: #{rnnlm_sequence.1} parent=1 // pred_region
      _
    $region17: #{rnnlm_sequence.1} parent=1 // pred_fallthru
      _
    // Predicated region
    $region18: #{rnnlm_sequence.1} parent=1 // pred_check
      _
    $region19: #{rnnlm_sequence.1} parent=1 // pred_check_branch
      %29 = sbr.rel (0) target = $region21
    $region20: #{rnnlm_sequence.1} parent=1 // pred_region
      _
    $region21: #{rnnlm_sequence.1} parent=1 // pred_fallthru
      _
    // Predicated region
    $region22: #{rnnlm_sequence.1} parent=1 // pred_check
      _
    $region23: #{rnnlm_sequence.1} parent=1 // pred_check_branch
      %31 = sbr.rel (0) target = $region25
    $region24: #{rnnlm_sequence.1} parent=1 // pred_region
      _
    $region25: #{rnnlm_sequence.1} parent=1 // pred_fallthru
      _
    // Predicated region
    $region26: #{rnnlm_sequence.1} parent=1 // pred_check
      _
    $region27: #{rnnlm_sequence.1} parent=1 // pred_check_branch
      %33 = sbr.rel (0) target = $region29
    $region28: #{rnnlm_sequence.1} parent=1 // pred_region
      _
    $region29: #{rnnlm_sequence.1} parent=1 // pred_fallthru
      _
    // Predicated region
    $region30: #{rnnlm_sequence.1} parent=1 // pred_check
      _
    $region31: #{rnnlm_sequence.1} parent=1 // pred_check_branch
      %35 = sbr.rel (0) target = $region33
    $region32: #{rnnlm_sequence.1} parent=1 // pred_region
      _
    $region33: #{rnnlm_sequence.1} parent=1 // pred_fallthru
      _
    // Predicated region
    $region34: #{rnnlm_sequence.1} parent=1 // pred_check
      _
    $region35: #{rnnlm_sequence.1} parent=1 // pred_check_branch
      %37 = sbr.rel (0) target = $region37
    $region36: #{rnnlm_sequence.1} parent=1 // pred_region
      _
    $region37: #{rnnlm_sequence.1} parent=1 // pred_fallthru
      _
    // Predicated region
    $region38: #{rnnlm_sequence.1} parent=1 // pred_check
      _
    $region39: #{rnnlm_sequence.1} parent=1 // pred_check_branch
      %39 = sbr.rel (0) target = $region41
    $region40: #{rnnlm_sequence.1} parent=1 // pred_region
      _
    $region41: #{rnnlm_sequence.1} parent=1 // pred_fallthru
      _
    // Predicated region
    $region42: #{rnnlm_sequence.1} parent=1 // pred_check
      _
    $region43: #{rnnlm_sequence.1} parent=1 // pred_check_branch
      %41 = sbr.rel (0) target = $region45
    $region44: #{rnnlm_sequence.1} parent=1 // pred_region
      _
    $region45: #{rnnlm_sequence.1} parent=1 // pred_fallthru
      _
    %p43 = scmp.eq.s32.totalorder 0, 0
    // Predicated region
    $region46: #{rnnlm_sequence.1} parent=1 // pred_check
      %p44 = pneg %p43
    $region47: #{rnnlm_sequence.1} parent=1 // pred_check_branch
      %46 = sbr.rel (%p44) target = $region49
    $region48: #{rnnlm_sequence.1} parent=1 // pred_region
      %v47 = vld [vmem:[%s2] sm:$0xff]
      %48 = vst [vmem:[%s11] sm:$0xff] %v47
    $region49: #{rnnlm_sequence.1} parent=1 // pred_fallthru
      _
    %v49 = vld [vmem:[%s11] sm:$0xff]
    %v50 = vlaneseq
    %v51 = vand.u32 %v50, 127
    %v52 = vld [vmem:[%s0] sm:$0xff]
    %53 = vset.pattern.permute.xlu0 0
    %54 = vperm.xlu0 %53, %v52
    %v55 = vpop.permute.xlu0 %54
    %vm56 = vcmp.eq.s32.totalorder %v51, %v55
    %v57 = vsel %vm56, 1, 0
    %v58 = vcvt.s32.f32 %v57
    %v59 = vpack.c.bf16 %v58, %v58
    %v60 = vld [vmem:[%s3] sm:$0xf]
    %v61 = vld [vmem:[%s3 + $0x4] sm:$0xf]
    %v62 = vld [vmem:[%s3 + $0x8] sm:$0xf]
    %v63 = vld [vmem:[%s3 + $0xc] sm:$0xf]
    %v64 = vld [vmem:[%s3 + $0x10] sm:$0xf]
    %v65 = vld [vmem:[%s3 + $0x14] sm:$0xf]
    %v66 = vld [vmem:[%s3 + $0x18] sm:$0xf]
    %v67 = vld [vmem:[%s3 + $0x1c] sm:$0xf]
    %v68 = vld [vmem:[%s3 + $0x20] sm:$0xf]
    %v69 = vld [vmem:[%s3 + $0x24] sm:$0xf]
    %v70 = vld [vmem:[%s3 + $0x28] sm:$0xf]
    %v71 = vld [vmem:[%s3 + $0x2c] sm:$0xf]
    %v72 = vld [vmem:[%s3 + $0x30] sm:$0xf]
    %v73 = vld [vmem:[%s3 + $0x34] sm:$0xf]
    %v74 = vld [vmem:[%s3 + $0x38] sm:$0xf]
    %v75 = vld [vmem:[%s3 + $0x3c] sm:$0xf]
    %v76 = vld [vmem:[%s5] sm:$0x1]
    %v78 = vlaneseq
    %v79 = vshrl.u32 %v78, 7
    %v80 = vsub.s32 0, %v79
    %v81 = vrot.slane %v76, %v80
    %v99 = vunpack.c.l.b16 %v60
    %v100 = vunpack.c.l.b16 %v61
    %v101 = vunpack.c.l.b16 %v62
    %v102 = vunpack.c.l.b16 %v63
    %v103 = vunpack.c.l.b16 %v64
    %v104 = vunpack.c.l.b16 %v65
    %v105 = vunpack.c.l.b16 %v66
    %v106 = vunpack.c.l.b16 %v67
    %v107 = vunpack.c.l.b16 %v68
    %v108 = vunpack.c.l.b16 %v69
    %v109 = vunpack.c.l.b16 %v70
    %v110 = vunpack.c.l.b16 %v71
    %v111 = vunpack.c.l.b16 %v72
    %v112 = vunpack.c.l.b16 %v73
    %v113 = vunpack.c.l.b16 %v74
    %v114 = vunpack.c.l.b16 %v75
    %v115 = vpack.c.b16 %v100, %v99
    %v116 = vpack.c.b16 %v102, %v101
    %v117 = vpack.c.b16 %v104, %v103
    %v118 = vpack.c.b16 %v106, %v105
    %v119 = vpack.c.b16 %v108, %v107
    %v120 = vpack.c.b16 %v110, %v109
    %v121 = vpack.c.b16 %v112, %v111
    %v122 = vpack.c.b16 %v114, %v113
    %131 = vmatprep.subr.bf16.mxu0 0
    %132 = vmatpush1.bf16.msra.mxu0 %v115
    %133 = vmatprep.subr.bf16.mxu0 0
    %134 = vmatpush1.bf16.msra.mxu0 %v116
    %135 = vmatprep.subr.bf16.mxu0 0
    %136 = vmatpush1.bf16.msra.mxu0 %v117
    %137 = vmatprep.subr.bf16.mxu0 0
    %138 = vmatpush1.bf16.msra.mxu0 %v118
    %139 = vmatprep.subr.bf16.mxu0 0
    %140 = vmatpush1.bf16.msra.mxu0 %v119
    %141 = vmatprep.subr.bf16.mxu0 0
    %142 = vmatpush1.bf16.msra.mxu0 %v120
    %143 = vmatprep.subr.bf16.mxu0 0
    %144 = vmatpush1.bf16.msra.mxu0 %v121
    %145 = vmatprep.subr.bf16.mxu0 0
    %146 = vmatpush1.bf16.msra.mxu0 %v122
    %147 = vmatprep.subr.bf16.mxu0 0
    %148 = vmatpush1.bf16.msra.mxu0 0
    %149 = vmatprep.subr.bf16.mxu0 0
    %150 = vmatpush1.bf16.msra.mxu0 0
    %151 = vmatprep.subr.bf16.mxu0 0
    %152 = vmatpush1.bf16.msra.mxu0 0
    %153 = vmatprep.subr.bf16.mxu0 0
    %154 = vmatpush1.bf16.msra.mxu0 0
    %155 = vmatprep.subr.bf16.mxu0 0
    %156 = vmatpush1.bf16.msra.mxu0 0
    %157 = vmatprep.subr.bf16.mxu0 0
    %158 = vmatpush1.bf16.msra.mxu0 0
    %159 = vmatprep.subr.bf16.mxu0 0
    %160 = vmatpush1.bf16.msra.mxu0 0
    %161 = vmatprep.subr.bf16.mxu0 0
    %162 = vmatpush1.bf16.msra.mxu0 0
    %163 = vmatprep.mubr.bf16.mxu0 0
    %164 = vmatmul.mubr.bf16.gmra.mrb[0].mxu0 %v59
    %v165 = vpop.f32.mrb[0].mxu0
    %v166 = vadd.f32 %v81, %v165
    %v167 = vpop.f32.mrb[0].mxu0
    %v168 = vpop.f32.mrb[0].mxu0
    %v169 = vpop.f32.mrb[0].mxu0
    %170 = vdwg.mxu0
    %v171 = vld [vmem:[%s4] sm:$0xf]
    %v172 = vld [vmem:[%s4 + $0x4] sm:$0xf]
    %v173 = vld [vmem:[%s4 + $0x8] sm:$0xf]
    %v174 = vld [vmem:[%s4 + $0xc] sm:$0xf]
    %v175 = vld [vmem:[%s6] sm:$0xf]
    %v176 = vld [vmem:[%s6 + $0x4] sm:$0xf]
    %v177 = vld [vmem:[%s6 + $0x8] sm:$0xf]
    %v178 = vld [vmem:[%s6 + $0xc] sm:$0xf]
    %v179 = vld [vmem:[%s7] sm:$0xf]
    %v180 = vld [vmem:[%s7 + $0x4] sm:$0xf]
    %v181 = vld [vmem:[%s7 + $0x8] sm:$0xf]
    %v182 = vld [vmem:[%s7 + $0xc] sm:$0xf]
    %v183 = vld [vmem:[%s8] sm:$0x1]
    %v185 = vlaneseq
    %v186 = vshrl.u32 %v185, 7
    %v187 = vsub.s32 0, %v186
    %v188 = vrot.slane %v183, %v187
    %v190 = vpack.c.bf16 %v49, %v49
    %v195 = vunpack.c.l.b16 %v171
    %v196 = vunpack.c.l.b16 %v172
    %v197 = vunpack.c.l.b16 %v173
    %v198 = vunpack.c.l.b16 %v174
    %v199 = vpack.c.b16 %v196, %v195
    %v200 = vpack.c.b16 %v198, %v197
    %vm203 = vcmask 261120
    %v205 = vsel %vm203, %v190, 0
    %207 = vmatprep.subr.bf16.mxu0 0
    %208 = vmatpush1.bf16.msra.mxu0 %v199
    %209 = vmatprep.subr.bf16.mxu0 0
    %210 = vmatpush1.bf16.msra.mxu0 %v200
    %211 = vmatprep.subr.bf16.mxu0 0
    %212 = vmatpush1.bf16.msra.mxu0 0
    %213 = vmatprep.subr.bf16.mxu0 0
    %214 = vmatpush1.bf16.msra.mxu0 0
    %215 = vmatprep.subr.bf16.mxu0 0
    %216 = vmatpush1.bf16.msra.mxu0 0
    %217 = vmatprep.subr.bf16.mxu0 0
    %218 = vmatpush1.bf16.msra.mxu0 0
    %219 = vmatprep.subr.bf16.mxu0 0
    %220 = vmatpush1.bf16.msra.mxu0 0
    %221 = vmatprep.subr.bf16.mxu0 0
    %222 = vmatpush1.bf16.msra.mxu0 0
    %223 = vmatprep.subr.bf16.mxu0 0
    %224 = vmatpush1.bf16.msra.mxu0 0
    %225 = vmatprep.subr.bf16.mxu0 0
    %226 = vmatpush1.bf16.msra.mxu0 0
    %227 = vmatprep.subr.bf16.mxu0 0
    %228 = vmatpush1.bf16.msra.mxu0 0
    %229 = vmatprep.subr.bf16.mxu0 0
    %230 = vmatpush1.bf16.msra.mxu0 0
    %231 = vmatprep.subr.bf16.mxu0 0
    %232 = vmatpush1.bf16.msra.mxu0 0
    %233 = vmatprep.subr.bf16.mxu0 0
    %234 = vmatpush1.bf16.msra.mxu0 0
    %235 = vmatprep.subr.bf16.mxu0 0
    %236 = vmatpush1.bf16.msra.mxu0 0
    %237 = vmatprep.subr.bf16.mxu0 0
    %238 = vmatpush1.bf16.msra.mxu0 0
    %239 = vmatprep.mubr.bf16.mxu0 0
    %240 = vmatmul.mubr.bf16.gmra.mrb[0].mxu0 %v205
    %v241 = vpop.f32.mrb[0].mxu0
    %v242 = vadd.f32 0.0, %v241
    %v243 = vpop.f32.mrb[0].mxu0
    %v244 = vpop.f32.mrb[0].mxu0
    %v245 = vpop.f32.mrb[0].mxu0
    %246 = vdwg.mxu0
    %v247 = vadd.f32 %v166, %v242
    %v248 = vxor.u32 %v247, 2147483648
    %v249 = vmul.f32 %v248, 1.442695
    %v250 = vpow.pop %v249
    %v251 = vadd.f32 %v250, 1.0
    %v252 = vrcp.pop %v251
    %v253 = vmul.f32 1.0, %v252
    %v254 = vtanh.pop %v247
    %256 = vrot.lane.b32.xlu0 %v49, 96
    %v257 = vpop.permute.xlu0 %256
    %v259 = vmul.f32 %v253, %v257
    %261 = vrot.lane.b32.xlu0 %v254, 64
    %v262 = vpop.permute.xlu0 %261
    %v264 = vmul.f32 %v253, %v262
    %266 = vrot.lane.b32.xlu0 %v264, 32
    %v267 = vpop.permute.xlu0 %266
    %v269 = vadd.f32 %v259, %v267
    %v270 = vtanh.pop %v269
    %272 = vrot.lane.b32.xlu0 %v270, 64
    %v273 = vpop.permute.xlu0 %272
    %v275 = vmul.f32 %v253, %v273
    %v276 = vpack.c.bf16 %v275, %v275
    %278 = vrot.lane.b32.xlu0 %v190, 96
    %v279 = vpop.permute.xlu0 %278
    %v284 = vunpack.c.l.b16 %v179
    %v285 = vunpack.c.l.b16 %v180
    %v286 = vunpack.c.l.b16 %v181
    %v287 = vunpack.c.l.b16 %v182
    %v288 = vpack.c.b16 %v285, %v284
    %v289 = vpack.c.b16 %v287, %v286
    %v293 = vsel %vm203, %v279, 0
    %295 = vmatprep.subr.bf16.mxu0 0
    %296 = vmatpush1.bf16.msra.mxu0 %v288
    %297 = vmatprep.subr.bf16.mxu0 0
    %298 = vmatpush1.bf16.msra.mxu0 %v289
    %299 = vmatprep.subr.bf16.mxu0 0
    %300 = vmatpush1.bf16.msra.mxu0 0
    %301 = vmatprep.subr.bf16.mxu0 0
    %302 = vmatpush1.bf16.msra.mxu0 0
    %303 = vmatprep.subr.bf16.mxu0 0
    %304 = vmatpush1.bf16.msra.mxu0 0
    %305 = vmatprep.subr.bf16.mxu0 0
    %306 = vmatpush1.bf16.msra.mxu0 0
    %307 = vmatprep.subr.bf16.mxu0 0
    %308 = vmatpush1.bf16.msra.mxu0 0
    %309 = vmatprep.subr.bf16.mxu0 0
    %310 = vmatpush1.bf16.msra.mxu0 0
    %311 = vmatprep.subr.bf16.mxu0 0
    %312 = vmatpush1.bf16.msra.mxu0 0
    %313 = vmatprep.subr.bf16.mxu0 0
    %314 = vmatpush1.bf16.msra.mxu0 0
    %315 = vmatprep.subr.bf16.mxu0 0
    %316 = vmatpush1.bf16.msra.mxu0 0
    %317 = vmatprep.subr.bf16.mxu0 0
    %318 = vmatpush1.bf16.msra.mxu0 0
    %319 = vmatprep.subr.bf16.mxu0 0
    %320 = vmatpush1.bf16.msra.mxu0 0
    %321 = vmatprep.subr.bf16.mxu0 0
    %322 = vmatpush1.bf16.msra.mxu0 0
    %323 = vmatprep.subr.bf16.mxu0 0
    %324 = vmatpush1.bf16.msra.mxu0 0
    %325 = vmatprep.subr.bf16.mxu0 0
    %326 = vmatpush1.bf16.msra.mxu0 0
    %327 = vmatprep.mubr.bf16.mxu0 0
    %328 = vmatmul.mubr.bf16.gmra.mrb[0].mxu0 %v293
    %v329 = vpop.f32.mrb[0].mxu0
    %v330 = vadd.f32 0.0, %v329
    %v331 = vpop.f32.mrb[0].mxu0
    %v332 = vpop.f32.mrb[0].mxu0
    %v333 = vpop.f32.mrb[0].mxu0
    %334 = vdwg.mxu0
    %336 = vrot.lane.b32.xlu0 %v276, 32
    %v337 = vpop.permute.xlu0 %336
    %v342 = vunpack.c.l.b16 %v175
    %v343 = vunpack.c.l.b16 %v176
    %v344 = vunpack.c.l.b16 %v177
    %v345 = vunpack.c.l.b16 %v178
    %v346 = vpack.c.b16 %v343, %v342
    %v347 = vpack.c.b16 %v345, %v344
    %v351 = vsel %vm203, %v337, 0
    %353 = vmatprep.subr.bf16.mxu0 0
    %354 = vmatpush1.bf16.msra.mxu0 %v346
    %355 = vmatprep.subr.bf16.mxu0 0
    %356 = vmatpush1.bf16.msra.mxu0 %v347
    %357 = vmatprep.subr.bf16.mxu0 0
    %358 = vmatpush1.bf16.msra.mxu0 0
    %359 = vmatprep.subr.bf16.mxu0 0
    %360 = vmatpush1.bf16.msra.mxu0 0
    %361 = vmatprep.subr.bf16.mxu0 0
    %362 = vmatpush1.bf16.msra.mxu0 0
    %363 = vmatprep.subr.bf16.mxu0 0
    %364 = vmatpush1.bf16.msra.mxu0 0
    %365 = vmatprep.subr.bf16.mxu0 0
    %366 = vmatpush1.bf16.msra.mxu0 0
    %367 = vmatprep.subr.bf16.mxu0 0
    %368 = vmatpush1.bf16.msra.mxu0 0
    %369 = vmatprep.subr.bf16.mxu0 0
    %370 = vmatpush1.bf16.msra.mxu0 0
    %371 = vmatprep.subr.bf16.mxu0 0
    %372 = vmatpush1.bf16.msra.mxu0 0
    %373 = vmatprep.subr.bf16.mxu0 0
    %374 = vmatpush1.bf16.msra.mxu0 0
    %375 = vmatprep.subr.bf16.mxu0 0
    %376 = vmatpush1.bf16.msra.mxu0 0
    %377 = vmatprep.subr.bf16.mxu0 0
    %378 = vmatpush1.bf16.msra.mxu0 0
    %379 = vmatprep.subr.bf16.mxu0 0
    %380 = vmatpush1.bf16.msra.mxu0 0
    %381 = vmatprep.subr.bf16.mxu0 0
    %382 = vmatpush1.bf16.msra.mxu0 0
    %383 = vmatprep.subr.bf16.mxu0 0
    %384 = vmatpush1.bf16.msra.mxu0 0
    %385 = vmatprep.mubr.bf16.mxu0 0
    %386 = vmatmul.mubr.bf16.gmra.mrb[0].mxu0 %v351
    %v387 = vpop.f32.mrb[0].mxu0
    %v388 = vadd.f32 %v330, %v387
    %v389 = vpop.f32.mrb[0].mxu0
    %v390 = vpop.f32.mrb[0].mxu0
    %v391 = vpop.f32.mrb[0].mxu0
    %392 = vdwg.mxu0
    %v393 = vadd.f32 %v388, %v188
    %v394 = vxor.u32 %v393, 2147483648
    %v395 = vmul.f32 %v394, 1.442695
    %v396 = vpow.pop %v395
    %v397 = vadd.f32 %v396, 1.0
    %v398 = vrcp.pop %v397
    %v399 = vmul.f32 1.0, %v398
    %v400 = vtanh.pop %v393
    %401 = vrot.lane.b32.xlu0 %v49, 64
    %v402 = vpop.permute.xlu0 %401
    %v404 = vmul.f32 %v399, %v402
    %406 = vrot.lane.b32.xlu0 %v400, 64
    %v407 = vpop.permute.xlu0 %406
    %v409 = vmul.f32 %v399, %v407
    %411 = vrot.lane.b32.xlu0 %v409, 32
    %v412 = vpop.permute.xlu0 %411
    %v414 = vadd.f32 %v404, %v412
    %v415 = vtanh.pop %v414
    %417 = vrot.lane.b32.xlu0 %v415, 64
    %v418 = vpop.permute.xlu0 %417
    %v420 = vmul.f32 %v399, %v418
    %422 = vrot.lane.b32.xlu0 %v420, 32
    %v423 = vpop.permute.xlu0 %422
    %425 = vst.msk [vmem:[#allocation2] sm:$0xff] %vm203, %v423
    %427 = vrot.lane.b32.xlu0 %v275, 32
    %v428 = vpop.permute.xlu0 %427
    %430 = vrot.lane.b32.xlu0 %v420, 64
    %v431 = vpop.permute.xlu0 %430
    %434 = vrot.lane.b32.xlu0 %v269, 32
    %v435 = vpop.permute.xlu0 %434
    %438 = vrot.lane.b32.xlu0 %v414, 64
    %v439 = vpop.permute.xlu0 %438
    %v441 = vsel %vm203, %v428, %v431
    %vm442 = vcmask 523264
    %v443 = vsel %vm442, %v441, %v435
    %vm444 = vcmask 785408
    %v445 = vsel %vm444, %v443, %v439
    %446 = vst [vmem:[%s11] sm:$0xff] %v445
    %v447 = vld [vmem:[#allocation2] sm:$0xff]
    %v448 = vpack.c.bf16 %v447, %v447
    %v449 = vld [vmem:[%s9] sm:$0xf]
    %v450 = vld [vmem:[%s9 + $0x4] sm:$0xf]
    %v451 = vld [vmem:[%s9 + $0x8] sm:$0xf]
    %v452 = vld [vmem:[%s9 + $0xc] sm:$0xf]
    %v453 = vld [vmem:[%s10] sm:$0x1]
    %v455 = vlaneseq
    %v456 = vshrl.u32 %v455, 7
    %v457 = vsub.s32 0, %v456
    %v458 = vrot.slane %v453, %v457
    %v464 = vunpack.c.l.b16 %v449
    %v465 = vunpack.c.l.b16 %v450
    %v466 = vunpack.c.l.b16 %v451
    %v467 = vunpack.c.l.b16 %v452
    %v468 = vpack.c.b16 %v465, %v464
    %v469 = vpack.c.b16 %v467, %v466
    %v473 = vsel %vm203, %v448, 0
    %475 = vmatprep.subr.bf16.mxu0 0
    %476 = vmatpush1.bf16.msra.mxu0 %v468
    %477 = vmatprep.subr.bf16.mxu0 0
    %478 = vmatpush1.bf16.msra.mxu0 %v469
    %479 = vmatprep.subr.bf16.mxu0 0
    %480 = vmatpush1.bf16.msra.mxu0 0
    %481 = vmatprep.subr.bf16.mxu0 0
    %482 = vmatpush1.bf16.msra.mxu0 0
    %483 = vmatprep.subr.bf16.mxu0 0
    %484 = vmatpush1.bf16.msra.mxu0 0
    %485 = vmatprep.subr.bf16.mxu0 0
    %486 = vmatpush1.bf16.msra.mxu0 0
    %487 = vmatprep.subr.bf16.mxu0 0
    %488 = vmatpush1.bf16.msra.mxu0 0
    %489 = vmatprep.subr.bf16.mxu0 0
    %490 = vmatpush1.bf16.msra.mxu0 0
    %491 = vmatprep.subr.bf16.mxu0 0
    %492 = vmatpush1.bf16.msra.mxu0 0
    %493 = vmatprep.subr.bf16.mxu0 0
    %494 = vmatpush1.bf16.msra.mxu0 0
    %495 = vmatprep.subr.bf16.mxu0 0
    %496 = vmatpush1.bf16.msra.mxu0 0
    %497 = vmatprep.subr.bf16.mxu0 0
    %498 = vmatpush1.bf16.msra.mxu0 0
    %499 = vmatprep.subr.bf16.mxu0 0
    %500 = vmatpush1.bf16.msra.mxu0 0
    %501 = vmatprep.subr.bf16.mxu0 0
    %502 = vmatpush1.bf16.msra.mxu0 0
    %503 = vmatprep.subr.bf16.mxu0 0
    %504 = vmatpush1.bf16.msra.mxu0 0
    %505 = vmatprep.subr.bf16.mxu0 0
    %506 = vmatpush1.bf16.msra.mxu0 0
    %507 = vmatprep.mubr.bf16.mxu0 0
    %508 = vmatmul.mubr.bf16.gmra.mrb[0].mxu0 %v473
    %v509 = vpop.f32.mrb[0].mxu0
    %v510 = vadd.f32 %v458, %v509
    %v511 = vpop.f32.mrb[0].mxu0
    %v512 = vpop.f32.mrb[0].mxu0
    %v513 = vpop.f32.mrb[0].mxu0
    %514 = vdwg.mxu0
    // Predicated region
    $region50: #{rnnlm_sequence.1} parent=1 // pred_check
      %p515 = pneg %p43
    $region51: #{rnnlm_sequence.1} parent=1 // pred_check_branch
      %517 = sbr.rel (%p515) target = $region53
    $region52: #{rnnlm_sequence.1} parent=1 // pred_region
      %518 = vst [vmem:[#allocation3] sm:$0xff] %v510
    $region53: #{rnnlm_sequence.1} parent=1 // pred_fallthru
      _
    %v519 = vld [vmem:[%s1] sm:$0xff]
    %520 = vset.pattern.permute.xlu0 0
    %521 = vperm.xlu0 %520, %v519
    %v522 = vpop.permute.xlu0 %521
    %vm523 = vcmp.eq.s32.totalorder %v51, %v522
    %v524 = vsel %vm523, 1, 0
    %v525 = vcvt.s32.f32 %v524
    %526 = vmax.xlane.f32.xlu0 %v510
    %v527 = vpop.xlane.xlu0 %526
    %v528 = vsub.f32 %v510, %v527
    %v529 = vmul.f32 %v528, 1.442695
    %v530 = vpow.pop %v529
    %531 = vadd.xlane.f32.xlu0 %v530
    %v532 = vpop.xlane.xlu0 %531
    %v533 = vlog2.pop %v532
    %v534 = vmul.f32 %v533, 0.6931472
    %v535 = vadd.f32 %v527, %v534
    %v536 = vmul.f32 %v510, %v525
    %537 = vadd.xlane.f32.xlu0 %v536
    %v538 = vpop.xlane.xlu0 %537
    %v539 = vsub.f32 %v535, %v538
    %vm540 = vcmask 7168
    %541 = vst.msk [vmem:[%s13] sm:$0xff] %vm540, %v539
    // Predicated region
    $region54: #{rnnlm_sequence.1} parent=1 // pred_check
      _
    $region55: #{rnnlm_sequence.1} parent=1 // pred_check_branch
      %543 = sbr.rel (0) target = $region57
    $region56: #{rnnlm_sequence.1} parent=1 // pred_region
      _
    $region57: #{rnnlm_sequence.1} parent=1 // pred_fallthru
      _
    // Predicated region
    $region58: #{rnnlm_sequence.1} parent=1 // pred_check
      _
    $region59: #{rnnlm_sequence.1} parent=1 // pred_check_branch
      %545 = sbr.rel (0) target = $region61
    $region60: #{rnnlm_sequence.1} parent=1 // pred_region
      %s547 = ssub.s32 128, 128
      %548 = vsyncadd [#allocation4], %s547
      %s550 = sshll.u32 [#allocation3], 4
      %s551 = int_to_ptr.vmem [resolvable:$true] %s550
      %553 = dma.vmem_to_hbm [thread:$0]  %s551, 128, %s12, [#allocation4]
    $region61: #{rnnlm_sequence.1} parent=1 // pred_fallthru
      _
    // Predicated region
    $region62: #{rnnlm_sequence.1} parent=1 // pred_check
      _
    $region63: #{rnnlm_sequence.1} parent=1 // pred_check_branch
      %555 = sbr.rel (0) target = $region65
    $region64: #{rnnlm_sequence.1} parent=1 // pred_region
      _
    $region65: #{rnnlm_sequence.1} parent=1 // pred_fallthru
      _
    // Predicated region
    $region66: #{rnnlm_sequence.1} parent=1 // pred_check
      _
    $region67: #{rnnlm_sequence.1} parent=1 // pred_check_branch
      %557 = sbr.rel (0) target = $region69
    $region68: #{rnnlm_sequence.1} parent=1 // pred_region
      _
    $region69: #{rnnlm_sequence.1} parent=1 // pred_fallthru
      _
    // Predicated region
    $region70: #{rnnlm_sequence.1} parent=1 // pred_check
      _
    $region71: #{rnnlm_sequence.1} parent=1 // pred_check_branch
      %559 = sbr.rel (0) target = $region73
    $region72: #{rnnlm_sequence.1} parent=1 // pred_region
      %560 = dma.done [#allocation4], 128
    $region73: #{rnnlm_sequence.1} parent=1 // pred_fallthru
      _
    // Predicated region
    $region74: #{rnnlm_sequence.1} parent=1 // pred_check
      _
    $region75: #{rnnlm_sequence.1} parent=1 // pred_check_branch
      %562 = sbr.rel (0) target = $region77
    $region76: #{rnnlm_sequence.1} parent=1 // pred_region
      _
    $region77: #{rnnlm_sequence.1} parent=1 // pred_fallthru
      _
    %563 = vsyncpa [#allocation4], 1

</llo_original>
